<compile_context>
chip_gen: v6e
topology: v6e:2x2x1
jax: 0.10.0
libtpu: 0.0.40
codegen_flags: <defaults>
</compile_context>

<pallas_src>
import math

import jax
import jax.numpy as jnp
from jax.experimental import pallas as pl
from jax.experimental.pallas import tpu as pltpu


def _attn_memory_kernel(mkt_ref, qk_ref, out_ref):
    """One (batch, query-tile) grid step.

    mkt_ref: (HW, CK)  memory keys for this batch, pre-transposed (canonical LHS)
    qk_ref : (CK, TN)  query-key column tile (lane-dense in TN)
    out_ref: (HW, TN)  affinity column tile; softmax over axis 0 (memory axis)
    """
    ck = qk_ref.shape[0]
    scale = 1.0 / math.sqrt(ck)

    # Cheapest place to apply the 1/sqrt(CK) scale: CK*TN elements.
    qk = qk_ref[...] * scale

    # Canonical [HW,CK] x [CK,TN] MXU matmul; f32 accumulation.
    s = jnp.dot(mkt_ref[...], qk, preferred_element_type=jnp.float32)  # (HW, TN)

    # Softmax over the memory axis (axis 0) == torch softmax(dim=1).
    m = jnp.max(s, axis=0, keepdims=True)                              # (1, TN)

    if out_ref.dtype == jnp.float32:
        # Reuse out_ref as the exp buffer: drops one HW*TN f32 VMEM temporary.
        out_ref[...] = jnp.exp(s - m)
        denom = jnp.sum(out_ref[...], axis=0, keepdims=True)           # (1, TN)
        out_ref[...] = out_ref[...] * pl.reciprocal(denom, approx=False)
    else:
        # Low-precision output: keep all softmax math in f32, round at the store.
        e = jnp.exp(s - m)                                             # (HW, TN)
        denom = jnp.sum(e, axis=0, keepdims=True)                      # (1, TN)
        out_ref[...] = (e * pl.reciprocal(denom, approx=False)).astype(out_ref.dtype)


def _vmem_capacity_bytes():
    """Per-core VMEM capacity; conservative v7x fallback if the query fails."""
    try:
        cap = int(pltpu.get_tpu_info().vmem_capacity_bytes)
        if cap > 0:
            return cap
    except Exception:
        pass
    return 64 << 20  # v7x per-TensorCore VMEM (smallest of the listed chips)


def _vmem_need_bytes(hw, tn, out_itemsize):
    """Per-grid-step VMEM footprint estimate (default double-buffering)."""
    mk_buf = 2 * hw * 128 * 4          # (HW, CK) LHS, CK lane-padded to 128
    qk_buf = 2 * 8 * tn * 4            # (CK, TN), CK sublane-padded to 8
    out_buf = 2 * hw * tn * out_itemsize
    temps = 2 * hw * tn * 4            # matmul result s + epilogue slack (f32)
    return mk_buf + qk_buf + out_buf + temps


def _pick_tn(hw, batch, out_itemsize, vmem_cap):
    """Largest lane-dense query-tile width that divides HW and fits VMEM."""
    # Leave room for double-buffered DMA / compiler scratch out of the cap.
    tile_budget = min(int(vmem_cap * 0.55), vmem_cap - (24 << 20))
    tn = None
    for cand in (1024, 512, 256, 128):
        if hw % cand == 0 and _vmem_need_bytes(hw, cand, out_itemsize) <= tile_budget:
            tn = cand
            break
    if tn is None:
        # Smallest aligned tile, or a single full-extent block (still correct,
        # masked partial stores) when HW is not 128-aligned.
        # TODO(synk): for HW >= ~16K on v7x a row-tiled two-pass softmax would
        # be needed to fit VMEM; not implemented here.
        tn = 128 if hw % 128 == 0 else hw
    # v7x has 2 TensorCores: if the whole grid would be a single step (B == 1,
    # one tile), split the query axis so both cores get work.
    if batch * (hw // tn) == 1 and tn % 2 == 0 and (tn // 2) >= 128:
        tn //= 2
    return tn


def attention_memory(mk, qk, *, tn=None, out_dtype=jnp.float32):
    """mk, qk: (B, CK, H, W) float32 (NCHW). Returns affinity (B, HW, HW)."""
    B, CK, H, W = mk.shape
    assert qk.shape == (B, CK, H, W)
    HW = H * W
    out_itemsize = jnp.dtype(out_dtype).itemsize

    vmem_cap = _vmem_capacity_bytes()
    if tn is None:
        tn = _pick_tn(HW, B, out_itemsize, vmem_cap)
    assert HW % tn == 0, "query tile must divide HW"
    n_tiles = HW // tn

    # Layout plumbing only (B*CK*HW elements each -- negligible vs B*HW^2 out):
    # pre-transpose mk so the kernel's matmul is in canonical MXU form.
    mk_t = jnp.transpose(mk.reshape(B, CK, HW), (0, 2, 1))   # (B, HW, CK)
    qk_r = qk.reshape(B, CK, HW)                              # (B, CK, HW)

    grid_spec = pltpu.PrefetchScalarGridSpec(
        num_scalar_prefetch=0,
        grid=(B, n_tiles),
        in_specs=[
            # mk^T: full (HW, CK) block; index constant over the query-tile
            # axis, so it is only re-fetched when the batch index changes.
            pl.BlockSpec((pl.Squeezed(), HW, CK), lambda b, n: (b, 0, 0)),
            # qk: lane-dense query column tile.
            pl.BlockSpec((pl.Squeezed(), CK, tn), lambda b, n: (b, 0, n)),
        ],
        out_specs=pl.BlockSpec((pl.Squeezed(), HW, tn), lambda b, n: (b, 0, n)),
    )

    need = _vmem_need_bytes(HW, tn, out_itemsize)
    vmem_limit = int(min(max(need + (8 << 20), 32 << 20), vmem_cap - (4 << 20)))

    # Advisory cost: bandwidth-heavy (output write dominates), tiny matmul.
    cost = pl.CostEstimate(
        flops=2 * B * CK * HW * HW,
        transcendentals=B * HW * HW,
        bytes_accessed=2 * 4 * B * CK * HW + out_itemsize * B * HW * HW,
    )

    return pl.pallas_call(
        _attn_memory_kernel,
        out_shape=jax.ShapeDtypeStruct((B, HW, HW), out_dtype),
        grid_spec=grid_spec,
        compiler_params=pltpu.CompilerParams(
            dimension_semantics=("parallel", "parallel"),
            vmem_limit_bytes=vmem_limit,
        ),
        cost_estimate=cost,
    )(mk_t, qk_r)


def attention_memory_ref(mk, qk):
    """Pure-JAX reference mirroring the PyTorch forward."""
    B, CK, H, W = mk.shape
    HW = H * W
    mk_t = jnp.transpose(mk.reshape(B, CK, HW), (0, 2, 1))    # (B, HW, CK)
    qk_r = qk.reshape(B, CK, HW) / math.sqrt(CK)               # (B, CK, HW)
    affinity = jnp.einsum("bmc,bcn->bmn", mk_t, qk_r)          # (B, HW, HW)
    return jax.nn.softmax(affinity, axis=1)


if __name__ == "__main__":
    # Small shapes consistent with the module's forward: B=2, CK=4, H=W=16.
    B, CK, H, W = 2, 4, 16, 16
    key = jax.random.PRNGKey(0)
    k_mk, k_qk = jax.random.split(key)
    mk = jax.random.normal(k_mk, (B, CK, H, W), dtype=jnp.float32)
    qk = jax.random.normal(k_qk, (B, CK, H, W), dtype=jnp.float32)

    ref = attention_memory_ref(mk, qk)

    # Default tiling (hardware-derived TN; single 256-wide query tile here).
    out = jax.block_until_ready(attention_memory(mk, qk))
    assert out.shape == (B, H * W, H * W)
    assert jnp.allclose(out, ref, atol=1e-5, rtol=1e-5), "mismatch vs reference"
    # Column-wise (dim=1) softmax must sum to 1 along axis 1.
    assert jnp.allclose(jnp.sum(out, axis=1), 1.0, atol=1e-5)

    # Exercise the multi-tile query grid path (grid=(B, 2)).
    out_tiled = jax.block_until_ready(attention_memory(mk, qk, tn=128))
    assert jnp.allclose(out_tiled, ref, atol=1e-5, rtol=1e-5), "tiled mismatch"

    # Exercise the bf16-writeback path (halves HBM store traffic); softmax math
    # stays f32 internally, so only final rounding error remains.
    out_bf16 = jax.block_until_ready(
        attention_memory(mk, qk, out_dtype=jnp.bfloat16))
    assert out_bf16.dtype == jnp.bfloat16
    assert jnp.allclose(out_bf16.astype(jnp.float32), ref, atol=3e-2, rtol=3e-2), \
        "bf16 mismatch"

    print("KERNEL_OK")
</pallas_src>

<mosaic_0001>
module attributes {stable_mosaic.version = 11 : i64} {
  func.func @_attn_memory_kernel(%arg0: i32, %arg1: i32, %arg2: memref<1x256x4xf32, #tpu.memory_space<vmem>>, %arg3: memref<1x4x256xf32, #tpu.memory_space<vmem>>, %arg4: memref<1x256x256xf32, #tpu.memory_space<vmem>>) attributes {dimension_semantics = [#tpu.dimension_semantics<parallel>, #tpu.dimension_semantics<parallel>], iteration_bounds = array<i64: 2, 1>, scalar_prefetch = 0 : i64, scratch_operands = 0 : i64, tpu.core_type = #tpu.core_type<tc>, window_params = [{transform_indices = @transform_0, window_bounds = array<i64: 1, 256, 4>}, {transform_indices = @transform_1, window_bounds = array<i64: 1, 4, 256>}, {transform_indices = @transform_2, window_bounds = array<i64: 1, 256, 256>}]} {
    %c0 = arith.constant 0 : index
    %c0_0 = arith.constant 0 : index
    %c0_1 = arith.constant 0 : index
    %0 = vector.load %arg3[%c0, %c0_0, %c0_1] : memref<1x4x256xf32, #tpu.memory_space<vmem>>, vector<1x4x256xf32>
    %1 = vector.shape_cast %0 : vector<1x4x256xf32> to vector<4x256xf32>
    %cst = arith.constant 5.000000e-01 : f32
    %2 = vector.broadcast %cst : f32 to vector<4x256xf32>
    %3 = arith.mulf %1, %2 : vector<4x256xf32>
    %c0_2 = arith.constant 0 : index
    %c0_3 = arith.constant 0 : index
    %c0_4 = arith.constant 0 : index
    %4 = vector.load %arg2[%c0_2, %c0_3, %c0_4] : memref<1x256x4xf32, #tpu.memory_space<vmem>>, vector<1x256x4xf32>
    %5 = vector.shape_cast %4 : vector<1x256x4xf32> to vector<256x4xf32>
    %cst_5 = arith.constant dense<0.000000e+00> : vector<256x256xf32>
    %6 = tpu.matmul %5, %3, %cst_5 {dimension_numbers = #tpu.dot_dimension_numbers<[1], [0], [0], [1], [0, 0, 1, 1], [], []>} : vector<256x4xf32>, vector<4x256xf32>, vector<256x256xf32> -> vector<256x256xf32>
    %cst_6 = arith.constant dense<0xFF800000> : vector<256xf32>
    %7 = vector.multi_reduction <maximumf>, %6, %cst_6 [0] : vector<256x256xf32> to vector<256xf32>
    %8 = vector.shape_cast %7 : vector<256xf32> to vector<1x256xf32>
    %9 = vector.broadcast %8 : vector<1x256xf32> to vector<256x256xf32>
    %10 = arith.subf %6, %9 : vector<256x256xf32>
    %11 = math.exp %10 : vector<256x256xf32>
    %c0_7 = arith.constant 0 : index
    %c0_8 = arith.constant 0 : index
    %c0_9 = arith.constant 0 : index
    %12 = vector.load %arg4[%c0_7, %c0_8, %c0_9] : memref<1x256x256xf32, #tpu.memory_space<vmem>>, vector<1x256x256xf32>
    %13 = vector.shape_cast %12 : vector<1x256x256xf32> to vector<256x256xf32>
    %14 = vector.shape_cast %11 : vector<256x256xf32> to vector<1x256x256xf32>
    tpu.vector_store %arg4[%c0_7, %c0_8, %c0_9], %14 {strides = array<i32>} : memref<1x256x256xf32, #tpu.memory_space<vmem>>, vector<1x256x256xf32>,
    %c0_10 = arith.constant 0 : index
    %c0_11 = arith.constant 0 : index
    %c0_12 = arith.constant 0 : index
    %15 = vector.load %arg4[%c0_10, %c0_11, %c0_12] : memref<1x256x256xf32, #tpu.memory_space<vmem>>, vector<1x256x256xf32>
    %16 = vector.shape_cast %15 : vector<1x256x256xf32> to vector<256x256xf32>
    %cst_13 = arith.constant dense<0.000000e+00> : vector<256xf32>
    %17 = vector.multi_reduction <add>, %16, %cst_13 [0] : vector<256x256xf32> to vector<256xf32>
    %18 = vector.shape_cast %17 : vector<256xf32> to vector<1x256xf32>
    %c0_14 = arith.constant 0 : index
    %c0_15 = arith.constant 0 : index
    %c0_16 = arith.constant 0 : index
    %19 = vector.load %arg4[%c0_14, %c0_15, %c0_16] : memref<1x256x256xf32, #tpu.memory_space<vmem>>, vector<1x256x256xf32>
    %20 = vector.shape_cast %19 : vector<1x256x256xf32> to vector<256x256xf32>
    %21 = tpu.reciprocal %18 : vector<1x256xf32> -> vector<1x256xf32>
    %22 = vector.broadcast %21 : vector<1x256xf32> to vector<256x256xf32>
    %23 = arith.mulf %20, %22 : vector<256x256xf32>
    %c0_17 = arith.constant 0 : index
    %c0_18 = arith.constant 0 : index
    %c0_19 = arith.constant 0 : index
    %24 = vector.load %arg4[%c0_17, %c0_18, %c0_19] : memref<1x256x256xf32, #tpu.memory_space<vmem>>, vector<1x256x256xf32>
    %25 = vector.shape_cast %24 : vector<1x256x256xf32> to vector<256x256xf32>
    %26 = vector.shape_cast %23 : vector<256x256xf32> to vector<1x256x256xf32>
    tpu.vector_store %arg4[%c0_17, %c0_18, %c0_19], %26 {strides = array<i32>} : memref<1x256x256xf32, #tpu.memory_space<vmem>>, vector<1x256x256xf32>,
    return
  }
  func.func @transform_0(%arg0: i32, %arg1: i32) -> (i32, i32, i32) {
    %c0_i32 = arith.constant 0 : i32
    %c0_i32_0 = arith.constant 0 : i32
    %c0_i32_1 = arith.constant 0 : i32
    return %arg0, %c0_i32, %c0_i32_0 : i32, i32, i32
  }
  func.func @transform_1(%arg0: i32, %arg1: i32) -> (i32, i32, i32) {
    %c0_i32 = arith.constant 0 : i32
    %c0_i32_0 = arith.constant 0 : i32
    return %arg0, %c0_i32, %arg1 : i32, i32, i32
  }
  func.func @transform_2(%arg0: i32, %arg1: i32) -> (i32, i32, i32) {
    %c0_i32 = arith.constant 0 : i32
    %c0_i32_0 = arith.constant 0 : i32
    return %arg0, %c0_i32, %arg1 : i32, i32, i32
  }
}

</mosaic_0001>

<llo_original>
// kernel: tpu_custom_call.1
$region0: #{tpu_custom_call.1}
  #allocation0 [shape = 'u32[]', space=smem, size = 0x4, offset = 0x4, fixed_abs, tag = 'smem constant byte address 0x4 - core index']
  #allocation1 [shape = 'u32[144,128]{1,0:T(1,128)}', space=vmem, size = 0x12000, scoped, tag = 'internal scratch']
  %s0 = inlined_call_operand.vmem [shape: f32[2,256,4], index: 0, kind: input, shape index: {}]
  %s1 = inlined_call_operand.vmem [shape: f32[2,4,256], index: 1, kind: input, shape index: {}]
  %s2 = inlined_call_operand.hbm [shape: f32[2,256,256], index: 2, kind: output, shape index: {}]
  %s3 = sld [smem:[#allocation0]]
  $region41: #{tpu_custom_call.1} parent=0
    _
  %s5 = ssub.s32 1, %s3
  %s6 = scalar_select 0, %s5, %s3
  $region1: #{tpu_custom_call.1} parent=0
    #allocation2 [shape = 'u8[524288]{0}', space=vmem, size = 0x80000, scoped, tag = 'output window, operand 0']
    #allocation3 [shape = 's32[2]{0}', space=sflag, size = 0x8, scoped, tag = 'scoped memory for tpu_custom_call.1']
    %7 = vsyncpa [#allocation3], 0
    %s8 = scalar_lea.sflag [#allocation3], 1
    %9 = vsyncpa %s8, 0
    loop: start=0, step=1, limit=4
    $region2: #{tpu_custom_call.1} parent=1 // loop_pre_header
      _
    $region3: #{tpu_custom_call.1} parent=1 // loop_header
      %s11 = sphi 0, %s15
      %p12 = scmp.ge.s32.totalorder %s11, 4
      %s18 = sphi 0, %s30
      %s19 = sphi 0, %s26
      %s20 = sphi 0, %s18
      %s21 = sphi 0, %s19
      %s22 = sphi 0, %s20
      %s23 = sphi 0, %s21
      %s33 = sphi 0, %s35
      %s36 = sphi 0, %s33
      %s37 = sphi 0, %s36
      %s53 = sphi 0, %s37
      %s61 = sphi 0, %s63
      %s64 = sphi 0, %s61
      %s65 = sphi 0, %s64
      %s81 = sphi 0, %s65
      %s89 = sphi 0, %s91
      %s92 = sphi 0, %s89
      %s93 = sphi 0, %s92
      %s109 = sphi 0, %s93
    $region4: #{tpu_custom_call.1} parent=1 // loop_header_branch
      %14 = sbr.rel (%p12) target = $region8
    $region5: #{tpu_custom_call.1} parent=1 // loop_body
      %s16 = ssub.s32 %s11, 1
      %s17 = ssub.s32 %s11, 2
      %s24 = sadd.s32 1, %s19
      %p25 = scmp.ge.s32.totalorder %s24, 1
      %s26 = scalar_select %p25, 0, %s24
      %s27 = sadd.s32 1, %s18
      %s28 = scalar_select %p25, %s27, %s18
      %p29 = scmp.ge.s32.totalorder %s28, 2
      %s30 = scalar_select %p29, 0, %s28
      %s31 = ssub.s32 %s18, %s30
      %p32 = scmp.eq.s32.totalorder %s31, 0
      %s34 = sadd.s32 %s33, 1
      %s35 = scalar_select %p32, %s33, %s34
      %p38 = pneg %p32
      %p39 = scmp.eq.s32.totalorder %s11, 1
      %p40 = por %p38, %p39
      %p41 = scmp.ne.s32.totalorder %s33, %s36
      %p42 = scmp.eq.s32.totalorder %s11, 0
      %p43 = por %p41, %p42
      %p44 = scmp.ne.s32.totalorder %s33, %s36
      %p45 = scmp.eq.s32.totalorder %s16, 1
      %p46 = por %p44, %p45
      %p47 = scmp.ne.s32.totalorder %s36, %s37
      %p48 = scmp.eq.s32.totalorder %s16, 0
      %p49 = por %p47, %p48
      %p50 = scmp.ne.s32.totalorder %s36, %s37
      %p51 = scmp.eq.s32.totalorder %s17, 1
      %p52 = por %p50, %p51
      %p54 = scmp.ne.s32.totalorder %s37, %s53
      %p55 = scmp.eq.s32.totalorder %s17, 0
      %p56 = por %p54, %p55
      %s57 = ssub.s32 %s18, %s30
      %s58 = ssub.s32 %s19, %s26
      %s59 = sor.u32 %s57, %s58
      %p60 = scmp.eq.s32.totalorder %s59, 0
      %s62 = sadd.s32 %s61, 1
      %s63 = scalar_select %p60, %s61, %s62
      %p66 = pneg %p60
      %p67 = scmp.eq.s32.totalorder %s11, 1
      %p68 = por %p66, %p67
      %p69 = scmp.ne.s32.totalorder %s61, %s64
      %p70 = scmp.eq.s32.totalorder %s11, 0
      %p71 = por %p69, %p70
      %p72 = scmp.ne.s32.totalorder %s61, %s64
      %p73 = scmp.eq.s32.totalorder %s16, 1
      %p74 = por %p72, %p73
      %p75 = scmp.ne.s32.totalorder %s64, %s65
      %p76 = scmp.eq.s32.totalorder %s16, 0
      %p77 = por %p75, %p76
      %p78 = scmp.ne.s32.totalorder %s64, %s65
      %p79 = scmp.eq.s32.totalorder %s17, 1
      %p80 = por %p78, %p79
      %p82 = scmp.ne.s32.totalorder %s65, %s81
      %p83 = scmp.eq.s32.totalorder %s17, 0
      %p84 = por %p82, %p83
      %s85 = ssub.s32 %s18, %s30
      %s86 = ssub.s32 %s19, %s26
      %s87 = sor.u32 %s85, %s86
      %p88 = scmp.eq.s32.totalorder %s87, 0
      %s90 = sadd.s32 %s89, 1
      %s91 = scalar_select %p88, %s89, %s90
      %p94 = pneg %p88
      %p95 = scmp.eq.s32.totalorder %s11, 1
      %p96 = por %p94, %p95
      %p97 = scmp.ne.s32.totalorder %s89, %s92
      %p98 = scmp.eq.s32.totalorder %s11, 0
      %p99 = por %p97, %p98
      %p100 = scmp.ne.s32.totalorder %s89, %s92
      %p101 = scmp.eq.s32.totalorder %s16, 1
      %p102 = por %p100, %p101
      %p103 = scmp.ne.s32.totalorder %s92, %s93
      %p104 = scmp.eq.s32.totalorder %s16, 0
      %p105 = por %p103, %p104
      %p106 = scmp.ne.s32.totalorder %s92, %s93
      %p107 = scmp.eq.s32.totalorder %s17, 1
      %p108 = por %p106, %p107
      %p110 = scmp.ne.s32.totalorder %s93, %s109
      %p111 = scmp.eq.s32.totalorder %s17, 0
      %p112 = por %p110, %p111
      %p113 = scmp.le.s32.totalorder 1, %s11
      %p114 = scmp.lt.s32.totalorder %s11, 3
      %p115 = pnand %p113, %p114
      %p116 = pneg %p115
      // Predicated region
      $region9: #{tpu_custom_call.1} parent=5 // pred_check
        _
      $region10: #{tpu_custom_call.1} parent=5 // pred_check_branch
        %118 = sbr.rel (%p115) target = $region12
      $region11: #{tpu_custom_call.1} parent=5 // pred_region
        %s119 = ssub.s32 %s11, 1
      $region12: #{tpu_custom_call.1} parent=5 // pred_fallthru
        _
      %p120 = scmp.lt.s32.totalorder %s11, 2
      // Predicated region
      $region13: #{tpu_custom_call.1} parent=5 // pred_check
        %p121 = pneg %p120
      $region14: #{tpu_custom_call.1} parent=5 // pred_check_branch
        %123 = sbr.rel (%p121) target = $region16
      $region15: #{tpu_custom_call.1} parent=5 // pred_region
        // Predicated region
        $region17: #{tpu_custom_call.1} parent=15 // pred_check
          %p124 = pneg %p43
        $region18: #{tpu_custom_call.1} parent=15 // pred_check_branch
          %126 = sbr.rel (%p124) target = $region20
        $region19: #{tpu_custom_call.1} parent=15 // pred_region
          %p127 = scmp.lt.s32.totalorder %s18, 1
          %s128 = scalar_select %p127, %s18, 1
          %s129 = smul.addr %s128, 32
          %s130 = smul.addr %s129, 8
          %s131 = scalar_lea.vmem %s0, %s130
        $region20: #{tpu_custom_call.1} parent=15 // pred_fallthru
          _
        // Predicated region
        $region21: #{tpu_custom_call.1} parent=15 // pred_check
          %p132 = pneg %p71
        $region22: #{tpu_custom_call.1} parent=15 // pred_check_branch
          %134 = sbr.rel (%p132) target = $region24
        $region23: #{tpu_custom_call.1} parent=15 // pred_region
          %s135 = smul.u32 2, %s19
          %p136 = scmp.lt.s32.totalorder %s18, 1
          %s137 = scalar_select %p136, %s18, 1
          %p138 = scmp.lt.s32.totalorder %s135, 1
          %s139 = scalar_select %p138, %s135, 1
          %s140 = smul.addr %s137, 2
          %s141 = sadd.s32 %s139, %s140
          %s142 = smul.addr %s141, 4
          %s143 = scalar_lea.vmem %s1, %s142
          %s144 = smul.u32 2, %s19
        $region24: #{tpu_custom_call.1} parent=15 // pred_fallthru
          _
      $region16: #{tpu_custom_call.1} parent=5 // pred_fallthru
        _
      %p145 = scmp.le.s32.totalorder 1, %s11
      %p146 = scmp.lt.s32.totalorder %s11, 3
      %p147 = pnand %p145, %p146
      %p148 = pneg %p147
      // Predicated region
      $region25: #{tpu_custom_call.1} parent=5 // pred_check
        _
      $region26: #{tpu_custom_call.1} parent=5 // pred_check_branch
        %150 = sbr.rel (%p147) target = $region28
      $region27: #{tpu_custom_call.1} parent=5 // pred_region
        %s151 = ssub.s32 %s11, 1
        %p152 = scmp.lt.s32.totalorder %s20, 1
        %s153 = scalar_select %p152, %s20, 1
        %s154 = smul.addr %s153, 32
        %s155 = smul.addr %s154, 8
        %s156 = scalar_lea.vmem %s0, %s155
        %p157 = pneg %p49
        %p158 = pneg %p46
        %s159 = smul.u32 2, %s21
        %p160 = scmp.lt.s32.totalorder %s20, 1
        %s161 = scalar_select %p160, %s20, 1
        %p162 = scmp.lt.s32.totalorder %s159, 1
        %s163 = scalar_select %p162, %s159, 1
        %s164 = smul.addr %s161, 2
        %s165 = sadd.s32 %s163, %s164
        %s166 = smul.addr %s165, 4
        %s167 = scalar_lea.vmem %s1, %s166
        %p168 = pneg %p77
        %p169 = pneg %p74
        %p170 = pneg %p105
        %p171 = pneg %p102
        %s172 = sand.u32 %s92, 1
        %s173 = scalar_lea.sflag [#allocation3], %s172
        %s174 = sand.u32 %s92, 1
        %s175 = smul.addr %s174, 512
        %s176 = scalar_lea.vmem [#allocation2], %s175
        %p177 = scmp.lt.s32.totalorder %s20, 1
        %s178 = scalar_select %p177, %s20, 1
        %s179 = smul.addr %s178, 32
        %s180 = smul.addr %s179, 8
        %s181 = scalar_lea.vmem %s0, %s180
        %s182 = smul.u32 2, %s21
        %p183 = scmp.lt.s32.totalorder %s20, 1
        %s184 = scalar_select %p183, %s20, 1
        %p185 = scmp.lt.s32.totalorder %s182, 1
        %s186 = scalar_select %p185, %s182, 1
        %s187 = smul.addr %s184, 2
        %s188 = sadd.s32 %s186, %s187
        %s189 = smul.addr %s188, 4
        %s190 = scalar_lea.vmem %s1, %s189
        %s191 = smul.u32 2, %s21
        %s192 = smul.u32 2, %s21
        %v193 = vld [vmem:[%s190] sm:$0xff]
        %v194 = vmul.f32 %v193, 0.5
        %v195 = vld [vmem:[%s181] sm:$0xff]
        %v196 = vld [vmem:[%s181 + $0x8] sm:$0xff]
        %v197 = vld [vmem:[%s181 + $0x10] sm:$0xff]
        %v198 = vld [vmem:[%s181 + $0x18] sm:$0xff]
        %v199 = vld [vmem:[%s181 + $0x20] sm:$0xff]
        %v200 = vld [vmem:[%s181 + $0x28] sm:$0xff]
        %v201 = vld [vmem:[%s181 + $0x30] sm:$0xff]
        %v202 = vld [vmem:[%s181 + $0x38] sm:$0xff]
        %v203 = vld [vmem:[%s181 + $0x40] sm:$0xff]
        %v204 = vld [vmem:[%s181 + $0x48] sm:$0xff]
        %v205 = vld [vmem:[%s181 + $0x50] sm:$0xff]
        %v206 = vld [vmem:[%s181 + $0x58] sm:$0xff]
        %v207 = vld [vmem:[%s181 + $0x60] sm:$0xff]
        %v208 = vld [vmem:[%s181 + $0x68] sm:$0xff]
        %v209 = vld [vmem:[%s181 + $0x70] sm:$0xff]
        %v210 = vld [vmem:[%s181 + $0x78] sm:$0xff]
        %v211 = vld [vmem:[%s181 + $0x80] sm:$0xff]
        %v212 = vld [vmem:[%s181 + $0x88] sm:$0xff]
        %v213 = vld [vmem:[%s181 + $0x90] sm:$0xff]
        %v214 = vld [vmem:[%s181 + $0x98] sm:$0xff]
        %v215 = vld [vmem:[%s181 + $0xa0] sm:$0xff]
        %v216 = vld [vmem:[%s181 + $0xa8] sm:$0xff]
        %v217 = vld [vmem:[%s181 + $0xb0] sm:$0xff]
        %v218 = vld [vmem:[%s181 + $0xb8] sm:$0xff]
        %v219 = vld [vmem:[%s181 + $0xc0] sm:$0xff]
        %v220 = vld [vmem:[%s181 + $0xc8] sm:$0xff]
        %v221 = vld [vmem:[%s181 + $0xd0] sm:$0xff]
        %v222 = vld [vmem:[%s181 + $0xd8] sm:$0xff]
        %v223 = vld [vmem:[%s181 + $0xe0] sm:$0xff]
        %v224 = vld [vmem:[%s181 + $0xe8] sm:$0xff]
        %v225 = vld [vmem:[%s181 + $0xf0] sm:$0xff]
        %v226 = vld [vmem:[%s181 + $0xf8] sm:$0xff]
        %v228 = vcombine.high %v194, %v194
        %vm229 = vcmask 31744
        %v231 = vsel %vm229, %v195, 0
        %v234 = vsel %vm229, %v196, 0
        %v237 = vsel %vm229, %v197, 0
        %v240 = vsel %vm229, %v198, 0
        %v243 = vsel %vm229, %v199, 0
        %v246 = vsel %vm229, %v200, 0
        %v249 = vsel %vm229, %v201, 0
        %v252 = vsel %vm229, %v202, 0
        %v255 = vsel %vm229, %v203, 0
        %v258 = vsel %vm229, %v204, 0
        %v261 = vsel %vm229, %v205, 0
        %v264 = vsel %vm229, %v206, 0
        %v267 = vsel %vm229, %v207, 0
        %v270 = vsel %vm229, %v208, 0
        %v273 = vsel %vm229, %v209, 0
        %v276 = vsel %vm229, %v210, 0
        %v279 = vsel %vm229, %v211, 0
        %v282 = vsel %vm229, %v212, 0
        %v285 = vsel %vm229, %v213, 0
        %v288 = vsel %vm229, %v214, 0
        %v291 = vsel %vm229, %v215, 0
        %v294 = vsel %vm229, %v216, 0
        %v297 = vsel %vm229, %v217, 0
        %v300 = vsel %vm229, %v218, 0
        %v303 = vsel %vm229, %v219, 0
        %v306 = vsel %vm229, %v220, 0
        %v309 = vsel %vm229, %v221, 0
        %v312 = vsel %vm229, %v222, 0
        %v315 = vsel %vm229, %v223, 0
        %v318 = vsel %vm229, %v224, 0
        %v321 = vsel %vm229, %v225, 0
        %v324 = vsel %vm229, %v226, 0
        %vm326 = vcmask 1043456
        %v327 = vsel %vm326, %v194, 0
        %v329 = vsel %vm326, %v228, 0
        %331 = vmatprep.subr.mxu0 0.0
        %332 = vmatpush1.msra.mxu0 0.0
        %333 = vmatprep.subr.mxu0 0.0
        %334 = vmatpush1.msra.mxu0 0.0
        %335 = vmatprep.subr.mxu0 0.0
        %336 = vmatpush1.msra.mxu0 0.0
        %337 = vmatprep.subr.mxu0 0.0
        %338 = vmatpush1.msra.mxu0 0.0
        %339 = vmatprep.subr.mxu0 0.0
        %340 = vmatpush1.msra.mxu0 0.0
        %341 = vmatprep.subr.mxu0 0.0
        %342 = vmatpush1.msra.mxu0 0.0
        %343 = vmatprep.subr.mxu0 0.0
        %344 = vmatpush1.msra.mxu0 0.0
        %345 = vmatprep.subr.mxu0 0.0
        %346 = vmatpush1.msra.mxu0 0.0
        %347 = vmatprep.subr.mxu0 0.0
        %348 = vmatpush1.msra.mxu0 0.0
        %349 = vmatprep.subr.mxu0 0.0
        %350 = vmatpush1.msra.mxu0 0.0
        %351 = vmatprep.subr.mxu0 0.0
        %352 = vmatpush1.msra.mxu0 0.0
        %353 = vmatprep.subr.mxu0 0.0
        %354 = vmatpush1.msra.mxu0 0.0
        %355 = vmatprep.subr.mxu0 0.0
        %356 = vmatpush1.msra.mxu0 0.0
        %357 = vmatprep.subr.mxu0 0.0
        %358 = vmatpush1.msra.mxu0 0.0
        %359 = vmatprep.subr.mxu0 0.0
        %360 = vmatpush1.msra.mxu0 0.0
        %361 = vmatprep.subr.mxu0 %v329
        %362 = vmatpush1.msra.mxu0 %v327
        %363 = vmatprep.subr.mxu0 0.0
        %364 = vmatpush2.msra.mxu0 0.0
        %365 = vmatprep.subr.mxu0 0.0
        %366 = vmatpush2.msra.mxu0 0.0
        %367 = vmatprep.subr.mxu0 0.0
        %368 = vmatpush2.msra.mxu0 0.0
        %369 = vmatprep.subr.mxu0 0.0
        %370 = vmatpush2.msra.mxu0 0.0
        %371 = vmatprep.subr.mxu0 0.0
        %372 = vmatpush2.msra.mxu0 0.0
        %373 = vmatprep.subr.mxu0 0.0
        %374 = vmatpush2.msra.mxu0 0.0
        %375 = vmatprep.subr.mxu0 0.0
        %376 = vmatpush2.msra.mxu0 0.0
        %377 = vmatprep.subr.mxu0 0.0
        %378 = vmatpush2.msra.mxu0 0.0
        %379 = vmatprep.subr.mxu0 0.0
        %380 = vmatpush2.msra.mxu0 0.0
        %381 = vmatprep.subr.mxu0 0.0
        %382 = vmatpush2.msra.mxu0 0.0
        %383 = vmatprep.subr.mxu0 0.0
        %384 = vmatpush2.msra.mxu0 0.0
        %385 = vmatprep.subr.mxu0 0.0
        %386 = vmatpush2.msra.mxu0 0.0
        %387 = vmatprep.subr.mxu0 0.0
        %388 = vmatpush2.msra.mxu0 0.0
        %389 = vmatprep.subr.mxu0 0.0
        %390 = vmatpush2.msra.mxu0 0.0
        %391 = vmatprep.subr.mxu0 0.0
        %392 = vmatpush2.msra.mxu0 0.0
        %393 = vmatprep.subr.mxu0 0.0
        %394 = vmatpush2.msra.mxu0 0.0
        %395 = vmatprep.mubr.f32.mxu0 0.0
        %396 = vmatmul.mubr.f32.gmra.mxu0 %v231
        %v397 = vpop.f32.mrf.mxu0
        %v398 = vadd.f32 0.0, %v397
        %v399 = vpop.f32.mrf.mxu0
        %v400 = vadd.f32 0.0, %v399
        %401 = vmatprep.mubr.f32.mxu0 0.0
        %402 = vmatmul.mubr.f32.gmra.mxu0 %v234
        %v403 = vpop.f32.mrf.mxu0
        %v404 = vadd.f32 0.0, %v403
        %v405 = vpop.f32.mrf.mxu0
        %v406 = vadd.f32 0.0, %v405
        %407 = vmatprep.mubr.f32.mxu0 0.0
        %408 = vmatmul.mubr.f32.gmra.mxu0 %v237
        %v409 = vpop.f32.mrf.mxu0
        %v410 = vadd.f32 0.0, %v409
        %v411 = vpop.f32.mrf.mxu0
        %v412 = vadd.f32 0.0, %v411
        %413 = vmatprep.mubr.f32.mxu0 0.0
        %414 = vmatmul.mubr.f32.gmra.mxu0 %v240
        %v415 = vpop.f32.mrf.mxu0
        %v416 = vadd.f32 0.0, %v415
        %v417 = vpop.f32.mrf.mxu0
        %v418 = vadd.f32 0.0, %v417
        %419 = vmatprep.mubr.f32.mxu0 0.0
        %420 = vmatmul.mubr.f32.gmra.mxu0 %v243
        %v421 = vpop.f32.mrf.mxu0
        %v422 = vadd.f32 0.0, %v421
        %v423 = vpop.f32.mrf.mxu0
        %v424 = vadd.f32 0.0, %v423
        %425 = vmatprep.mubr.f32.mxu0 0.0
        %426 = vmatmul.mubr.f32.gmra.mxu0 %v246
        %v427 = vpop.f32.mrf.mxu0
        %v428 = vadd.f32 0.0, %v427
        %v429 = vpop.f32.mrf.mxu0
        %v430 = vadd.f32 0.0, %v429
        %431 = vmatprep.mubr.f32.mxu0 0.0
        %432 = vmatmul.mubr.f32.gmra.mxu0 %v249
        %v433 = vpop.f32.mrf.mxu0
        %v434 = vadd.f32 0.0, %v433
        %v435 = vpop.f32.mrf.mxu0
        %v436 = vadd.f32 0.0, %v435
        %437 = vmatprep.mubr.f32.mxu0 0.0
        %438 = vmatmul.mubr.f32.gmra.mxu0 %v252
        %v439 = vpop.f32.mrf.mxu0
        %v440 = vadd.f32 0.0, %v439
        %v441 = vpop.f32.mrf.mxu0
        %v442 = vadd.f32 0.0, %v441
        %443 = vmatprep.mubr.f32.mxu0 0.0
        %444 = vmatmul.mubr.f32.gmra.mxu0 %v255
        %v445 = vpop.f32.mrf.mxu0
        %v446 = vadd.f32 0.0, %v445
        %v447 = vpop.f32.mrf.mxu0
        %v448 = vadd.f32 0.0, %v447
        %449 = vmatprep.mubr.f32.mxu0 0.0
        %450 = vmatmul.mubr.f32.gmra.mxu0 %v258
        %v451 = vpop.f32.mrf.mxu0
        %v452 = vadd.f32 0.0, %v451
        %v453 = vpop.f32.mrf.mxu0
        %v454 = vadd.f32 0.0, %v453
        %455 = vmatprep.mubr.f32.mxu0 0.0
        %456 = vmatmul.mubr.f32.gmra.mxu0 %v261
        %v457 = vpop.f32.mrf.mxu0
        %v458 = vadd.f32 0.0, %v457
        %v459 = vpop.f32.mrf.mxu0
        %v460 = vadd.f32 0.0, %v459
        %461 = vmatprep.mubr.f32.mxu0 0.0
        %462 = vmatmul.mubr.f32.gmra.mxu0 %v264
        %v463 = vpop.f32.mrf.mxu0
        %v464 = vadd.f32 0.0, %v463
        %v465 = vpop.f32.mrf.mxu0
        %v466 = vadd.f32 0.0, %v465
        %467 = vmatprep.mubr.f32.mxu0 0.0
        %468 = vmatmul.mubr.f32.gmra.mxu0 %v267
        %v469 = vpop.f32.mrf.mxu0
        %v470 = vadd.f32 0.0, %v469
        %v471 = vpop.f32.mrf.mxu0
        %v472 = vadd.f32 0.0, %v471
        %473 = vmatprep.mubr.f32.mxu0 0.0
        %474 = vmatmul.mubr.f32.gmra.mxu0 %v270
        %v475 = vpop.f32.mrf.mxu0
        %v476 = vadd.f32 0.0, %v475
        %v477 = vpop.f32.mrf.mxu0
        %v478 = vadd.f32 0.0, %v477
        %479 = vmatprep.mubr.f32.mxu0 0.0
        %480 = vmatmul.mubr.f32.gmra.mxu0 %v273
        %v481 = vpop.f32.mrf.mxu0
        %v482 = vadd.f32 0.0, %v481
        %v483 = vpop.f32.mrf.mxu0
        %v484 = vadd.f32 0.0, %v483
        %485 = vmatprep.mubr.f32.mxu0 0.0
        %486 = vmatmul.mubr.f32.gmra.mxu0 %v276
        %v487 = vpop.f32.mrf.mxu0
        %v488 = vadd.f32 0.0, %v487
        %v489 = vpop.f32.mrf.mxu0
        %v490 = vadd.f32 0.0, %v489
        %491 = vmatprep.mubr.f32.mxu0 0.0
        %492 = vmatmul.mubr.f32.gmra.mxu0 %v279
        %v493 = vpop.f32.mrf.mxu0
        %v494 = vadd.f32 0.0, %v493
        %v495 = vpop.f32.mrf.mxu0
        %v496 = vadd.f32 0.0, %v495
        %497 = vmatprep.mubr.f32.mxu0 0.0
        %498 = vmatmul.mubr.f32.gmra.mxu0 %v282
        %v499 = vpop.f32.mrf.mxu0
        %v500 = vadd.f32 0.0, %v499
        %v501 = vpop.f32.mrf.mxu0
        %v502 = vadd.f32 0.0, %v501
        %503 = vmatprep.mubr.f32.mxu0 0.0
        %504 = vmatmul.mubr.f32.gmra.mxu0 %v285
        %v505 = vpop.f32.mrf.mxu0
        %v506 = vadd.f32 0.0, %v505
        %v507 = vpop.f32.mrf.mxu0
        %v508 = vadd.f32 0.0, %v507
        %509 = vmatprep.mubr.f32.mxu0 0.0
        %510 = vmatmul.mubr.f32.gmra.mxu0 %v288
        %v511 = vpop.f32.mrf.mxu0
        %v512 = vadd.f32 0.0, %v511
        %v513 = vpop.f32.mrf.mxu0
        %v514 = vadd.f32 0.0, %v513
        %515 = vmatprep.mubr.f32.mxu0 0.0
        %516 = vmatmul.mubr.f32.gmra.mxu0 %v291
        %v517 = vpop.f32.mrf.mxu0
        %v518 = vadd.f32 0.0, %v517
        %v519 = vpop.f32.mrf.mxu0
        %v520 = vadd.f32 0.0, %v519
        %521 = vmatprep.mubr.f32.mxu0 0.0
        %522 = vmatmul.mubr.f32.gmra.mxu0 %v294
        %v523 = vpop.f32.mrf.mxu0
        %v524 = vadd.f32 0.0, %v523
        %v525 = vpop.f32.mrf.mxu0
        %v526 = vadd.f32 0.0, %v525
        %527 = vmatprep.mubr.f32.mxu0 0.0
        %528 = vmatmul.mubr.f32.gmra.mxu0 %v297
        %v529 = vpop.f32.mrf.mxu0
        %v530 = vadd.f32 0.0, %v529
        %v531 = vpop.f32.mrf.mxu0
        %v532 = vadd.f32 0.0, %v531
        %533 = vmatprep.mubr.f32.mxu0 0.0
        %534 = vmatmul.mubr.f32.gmra.mxu0 %v300
        %v535 = vpop.f32.mrf.mxu0
        %v536 = vadd.f32 0.0, %v535
        %v537 = vpop.f32.mrf.mxu0
        %v538 = vadd.f32 0.0, %v537
        %539 = vmatprep.mubr.f32.mxu0 0.0
        %540 = vmatmul.mubr.f32.gmra.mxu0 %v303
        %v541 = vpop.f32.mrf.mxu0
        %v542 = vadd.f32 0.0, %v541
        %v543 = vpop.f32.mrf.mxu0
        %v544 = vadd.f32 0.0, %v543
        %545 = vmatprep.mubr.f32.mxu0 0.0
        %546 = vmatmul.mubr.f32.gmra.mxu0 %v306
        %v547 = vpop.f32.mrf.mxu0
        %v548 = vadd.f32 0.0, %v547
        %v549 = vpop.f32.mrf.mxu0
        %v550 = vadd.f32 0.0, %v549
        %551 = vmatprep.mubr.f32.mxu0 0.0
        %552 = vmatmul.mubr.f32.gmra.mxu0 %v309
        %v553 = vpop.f32.mrf.mxu0
        %v554 = vadd.f32 0.0, %v553
        %v555 = vpop.f32.mrf.mxu0
        %v556 = vadd.f32 0.0, %v555
        %557 = vmatprep.mubr.f32.mxu0 0.0
        %558 = vmatmul.mubr.f32.gmra.mxu0 %v312
        %v559 = vpop.f32.mrf.mxu0
        %v560 = vadd.f32 0.0, %v559
        %v561 = vpop.f32.mrf.mxu0
        %v562 = vadd.f32 0.0, %v561
        %563 = vmatprep.mubr.f32.mxu0 0.0
        %564 = vmatmul.mubr.f32.gmra.mxu0 %v315
        %v565 = vpop.f32.mrf.mxu0
        %v566 = vadd.f32 0.0, %v565
        %v567 = vpop.f32.mrf.mxu0
        %v568 = vadd.f32 0.0, %v567
        %569 = vmatprep.mubr.f32.mxu0 0.0
        %570 = vmatmul.mubr.f32.gmra.mxu0 %v318
        %v571 = vpop.f32.mrf.mxu0
        %v572 = vadd.f32 0.0, %v571
        %v573 = vpop.f32.mrf.mxu0
        %v574 = vadd.f32 0.0, %v573
        %575 = vmatprep.mubr.f32.mxu0 0.0
        %576 = vmatmul.mubr.f32.gmra.mxu0 %v321
        %v577 = vpop.f32.mrf.mxu0
        %v578 = vadd.f32 0.0, %v577
        %v579 = vpop.f32.mrf.mxu0
        %v580 = vadd.f32 0.0, %v579
        %581 = vmatprep.mubr.f32.mxu0 0.0
        %582 = vmatmul.mubr.f32.gmra.mxu0 %v324
        %v583 = vpop.f32.mrf.mxu0
        %v584 = vadd.f32 0.0, %v583
        %v585 = vpop.f32.mrf.mxu0
        %v586 = vadd.f32 0.0, %v585
        %587 = vdwg.mxu0
        %v588 = vmax.f32 %v398, %v410
        %v589 = vmax.f32 %v404, %v416
        %v590 = vmax.f32 %v588, %v422
        %v591 = vmax.f32 %v589, %v428
        %v592 = vmax.f32 %v590, %v434
        %v593 = vmax.f32 %v591, %v440
        %v594 = vmax.f32 %v592, %v446
        %v595 = vmax.f32 %v593, %v452
        %v596 = vmax.f32 %v594, %v458
        %v597 = vmax.f32 %v595, %v464
        %v598 = vmax.f32 %v596, %v470
        %v599 = vmax.f32 %v597, %v476
        %v600 = vmax.f32 %v598, %v482
        %v601 = vmax.f32 %v599, %v488
        %v602 = vmax.f32 %v600, %v494
        %v603 = vmax.f32 %v601, %v500
        %v604 = vmax.f32 %v602, %v506
        %v605 = vmax.f32 %v603, %v512
        %v606 = vmax.f32 %v604, %v518
        %v607 = vmax.f32 %v605, %v524
        %v608 = vmax.f32 %v606, %v530
        %v609 = vmax.f32 %v607, %v536
        %v610 = vmax.f32 %v608, %v542
        %v611 = vmax.f32 %v609, %v548
        %v612 = vmax.f32 %v610, %v554
        %v613 = vmax.f32 %v611, %v560
        %v614 = vmax.f32 %v612, %v566
        %v615 = vmax.f32 %v613, %v572
        %v616 = vmax.f32 %v614, %v578
        %v617 = vmax.f32 %v615, %v584
        %v618 = vmax.f32 %v616, %v617
        %v619 = vrot.slane %v618, 4
        %v620 = vmax.f32 %v618, %v619
        %v621 = vrot.slane %v620, 2
        %v622 = vmax.f32 %v620, %v621
        %v623 = vrot.slane %v622, 1
        %v624 = vmax.f32 %v622, %v623
        %v625 = vmax.f32 %v400, %v412
        %v626 = vmax.f32 %v406, %v418
        %v627 = vmax.f32 %v625, %v424
        %v628 = vmax.f32 %v626, %v430
        %v629 = vmax.f32 %v627, %v436
        %v630 = vmax.f32 %v628, %v442
        %v631 = vmax.f32 %v629, %v448
        %v632 = vmax.f32 %v630, %v454
        %v633 = vmax.f32 %v631, %v460
        %v634 = vmax.f32 %v632, %v466
        %v635 = vmax.f32 %v633, %v472
        %v636 = vmax.f32 %v634, %v478
        %v637 = vmax.f32 %v635, %v484
        %v638 = vmax.f32 %v636, %v490
        %v639 = vmax.f32 %v637, %v496
        %v640 = vmax.f32 %v638, %v502
        %v641 = vmax.f32 %v639, %v508
        %v642 = vmax.f32 %v640, %v514
        %v643 = vmax.f32 %v641, %v520
        %v644 = vmax.f32 %v642, %v526
        %v645 = vmax.f32 %v643, %v532
        %v646 = vmax.f32 %v644, %v538
        %v647 = vmax.f32 %v645, %v544
        %v648 = vmax.f32 %v646, %v550
        %v649 = vmax.f32 %v647, %v556
        %v650 = vmax.f32 %v648, %v562
        %v651 = vmax.f32 %v649, %v568
        %v652 = vmax.f32 %v650, %v574
        %v653 = vmax.f32 %v651, %v580
        %v654 = vmax.f32 %v652, %v586
        %v655 = vmax.f32 %v653, %v654
        %v656 = vrot.slane %v655, 4
        %v657 = vmax.f32 %v655, %v656
        %v658 = vrot.slane %v657, 2
        %v659 = vmax.f32 %v657, %v658
        %v660 = vrot.slane %v659, 1
        %v661 = vmax.f32 %v659, %v660
        %v662 = vsub.f32 %v398, %v624
        %v663 = vsub.f32 %v400, %v661
        %v664 = vsub.f32 %v404, %v624
        %v665 = vsub.f32 %v406, %v661
        %v666 = vsub.f32 %v410, %v624
        %v667 = vsub.f32 %v412, %v661
        %v668 = vsub.f32 %v416, %v624
        %v669 = vsub.f32 %v418, %v661
        %v670 = vsub.f32 %v422, %v624
        %v671 = vsub.f32 %v424, %v661
        %v672 = vsub.f32 %v428, %v624
        %v673 = vsub.f32 %v430, %v661
        %v674 = vsub.f32 %v434, %v624
        %v675 = vsub.f32 %v436, %v661
        %v676 = vsub.f32 %v440, %v624
        %v677 = vsub.f32 %v442, %v661
        %v678 = vsub.f32 %v446, %v624
        %v679 = vsub.f32 %v448, %v661
        %v680 = vsub.f32 %v452, %v624
        %v681 = vsub.f32 %v454, %v661
        %v682 = vsub.f32 %v458, %v624
        %v683 = vsub.f32 %v460, %v661
        %v684 = vsub.f32 %v464, %v624
        %v685 = vsub.f32 %v466, %v661
        %v686 = vsub.f32 %v470, %v624
        %v687 = vsub.f32 %v472, %v661
        %v688 = vsub.f32 %v476, %v624
        %v689 = vsub.f32 %v478, %v661
        %v690 = vsub.f32 %v482, %v624
        %v691 = vsub.f32 %v484, %v661
        %v692 = vsub.f32 %v488, %v624
        %v693 = vsub.f32 %v490, %v661
        %v694 = vsub.f32 %v494, %v624
        %v695 = vsub.f32 %v496, %v661
        %v696 = vsub.f32 %v500, %v624
        %v697 = vsub.f32 %v502, %v661
        %v698 = vsub.f32 %v506, %v624
        %v699 = vsub.f32 %v508, %v661
        %v700 = vsub.f32 %v512, %v624
        %v701 = vsub.f32 %v514, %v661
        %v702 = vsub.f32 %v518, %v624
        %v703 = vsub.f32 %v520, %v661
        %v704 = vsub.f32 %v524, %v624
        %v705 = vsub.f32 %v526, %v661
        %v706 = vsub.f32 %v530, %v624
        %v707 = vsub.f32 %v532, %v661
        %v708 = vsub.f32 %v536, %v624
        %v709 = vsub.f32 %v538, %v661
        %v710 = vsub.f32 %v542, %v624
        %v711 = vsub.f32 %v544, %v661
        %v712 = vsub.f32 %v548, %v624
        %v713 = vsub.f32 %v550, %v661
        %v714 = vsub.f32 %v554, %v624
        %v715 = vsub.f32 %v556, %v661
        %v716 = vsub.f32 %v560, %v624
        %v717 = vsub.f32 %v562, %v661
        %v718 = vsub.f32 %v566, %v624
        %v719 = vsub.f32 %v568, %v661
        %v720 = vsub.f32 %v572, %v624
        %v721 = vsub.f32 %v574, %v661
        %v722 = vsub.f32 %v578, %v624
        %v723 = vsub.f32 %v580, %v661
        %v724 = vsub.f32 %v584, %v624
        %v725 = vsub.f32 %v586, %v661
        %v726 = vmul.f32 %v662, 1.442695
        %v727 = vpow.pop %v726
        %v728 = vmul.f32 %v663, 1.442695
        %v729 = vpow.pop %v728
        %v730 = vmul.f32 %v664, 1.442695
        %v731 = vpow.pop %v730
        %v732 = vmul.f32 %v665, 1.442695
        %v733 = vpow.pop %v732
        %v734 = vmul.f32 %v666, 1.442695
        %v735 = vpow.pop %v734
        %v736 = vmul.f32 %v667, 1.442695
        %v737 = vpow.pop %v736
        %v738 = vmul.f32 %v668, 1.442695
        %v739 = vpow.pop %v738
        %v740 = vmul.f32 %v669, 1.442695
        %v741 = vpow.pop %v740
        %v742 = vmul.f32 %v670, 1.442695
        %v743 = vpow.pop %v742
        %v744 = vmul.f32 %v671, 1.442695
        %v745 = vpow.pop %v744
        %v746 = vmul.f32 %v672, 1.442695
        %v747 = vpow.pop %v746
        %v748 = vmul.f32 %v673, 1.442695
        %v749 = vpow.pop %v748
        %v750 = vmul.f32 %v674, 1.442695
        %v751 = vpow.pop %v750
        %v752 = vmul.f32 %v675, 1.442695
        %v753 = vpow.pop %v752
        %v754 = vmul.f32 %v676, 1.442695
        %v755 = vpow.pop %v754
        %v756 = vmul.f32 %v677, 1.442695
        %v757 = vpow.pop %v756
        %v758 = vmul.f32 %v678, 1.442695
        %v759 = vpow.pop %v758
        %v760 = vmul.f32 %v679, 1.442695
        %v761 = vpow.pop %v760
        %v762 = vmul.f32 %v680, 1.442695
        %v763 = vpow.pop %v762
        %v764 = vmul.f32 %v681, 1.442695
        %v765 = vpow.pop %v764
        %v766 = vmul.f32 %v682, 1.442695
        %v767 = vpow.pop %v766
        %v768 = vmul.f32 %v683, 1.442695
        %v769 = vpow.pop %v768
        %v770 = vmul.f32 %v684, 1.442695
        %v771 = vpow.pop %v770
        %v772 = vmul.f32 %v685, 1.442695
        %v773 = vpow.pop %v772
        %v774 = vmul.f32 %v686, 1.442695
        %v775 = vpow.pop %v774
        %v776 = vmul.f32 %v687, 1.442695
        %v777 = vpow.pop %v776
        %v778 = vmul.f32 %v688, 1.442695
        %v779 = vpow.pop %v778
        %v780 = vmul.f32 %v689, 1.442695
        %v781 = vpow.pop %v780
        %v782 = vmul.f32 %v690, 1.442695
        %v783 = vpow.pop %v782
        %v784 = vmul.f32 %v691, 1.442695
        %v785 = vpow.pop %v784
        %v786 = vmul.f32 %v692, 1.442695
        %v787 = vpow.pop %v786
        %v788 = vmul.f32 %v693, 1.442695
        %v789 = vpow.pop %v788
        %v790 = vmul.f32 %v694, 1.442695
        %v791 = vpow.pop %v790
        %v792 = vmul.f32 %v695, 1.442695
        %v793 = vpow.pop %v792
        %v794 = vmul.f32 %v696, 1.442695
        %v795 = vpow.pop %v794
        %v796 = vmul.f32 %v697, 1.442695
        %v797 = vpow.pop %v796
        %v798 = vmul.f32 %v698, 1.442695
        %v799 = vpow.pop %v798
        %v800 = vmul.f32 %v699, 1.442695
        %v801 = vpow.pop %v800
        %v802 = vmul.f32 %v700, 1.442695
        %v803 = vpow.pop %v802
        %v804 = vmul.f32 %v701, 1.442695
        %v805 = vpow.pop %v804
        %v806 = vmul.f32 %v702, 1.442695
        %v807 = vpow.pop %v806
        %v808 = vmul.f32 %v703, 1.442695
        %v809 = vpow.pop %v808
        %v810 = vmul.f32 %v704, 1.442695
        %v811 = vpow.pop %v810
        %v812 = vmul.f32 %v705, 1.442695
        %v813 = vpow.pop %v812
        %v814 = vmul.f32 %v706, 1.442695
        %v815 = vpow.pop %v814
        %v816 = vmul.f32 %v707, 1.442695
        %v817 = vpow.pop %v816
        %v818 = vmul.f32 %v708, 1.442695
        %v819 = vpow.pop %v818
        %v820 = vmul.f32 %v709, 1.442695
        %v821 = vpow.pop %v820
        %v822 = vmul.f32 %v710, 1.442695
        %v823 = vpow.pop %v822
        %v824 = vmul.f32 %v711, 1.442695
        %v825 = vpow.pop %v824
        %v826 = vmul.f32 %v712, 1.442695
        %v827 = vpow.pop %v826
        %v828 = vmul.f32 %v713, 1.442695
        %v829 = vpow.pop %v828
        %v830 = vmul.f32 %v714, 1.442695
        %v831 = vpow.pop %v830
        %v832 = vmul.f32 %v715, 1.442695
        %v833 = vpow.pop %v832
        %v834 = vmul.f32 %v716, 1.442695
        %v835 = vpow.pop %v834
        %v836 = vmul.f32 %v717, 1.442695
        %v837 = vpow.pop %v836
        %v838 = vmul.f32 %v718, 1.442695
        %v839 = vpow.pop %v838
        %v840 = vmul.f32 %v719, 1.442695
        %v841 = vpow.pop %v840
        %v842 = vmul.f32 %v720, 1.442695
        %v843 = vpow.pop %v842
        %v844 = vmul.f32 %v721, 1.442695
        %v845 = vpow.pop %v844
        %v846 = vmul.f32 %v722, 1.442695
        %v847 = vpow.pop %v846
        %v848 = vmul.f32 %v723, 1.442695
        %v849 = vpow.pop %v848
        %v850 = vmul.f32 %v724, 1.442695
        %v851 = vpow.pop %v850
        %v852 = vmul.f32 %v725, 1.442695
        %v853 = vpow.pop %v852
        %854 = vst [vmem:[%s176] sm:$0xff] %v727
        %855 = vst [vmem:[%s176 + $0x8] sm:$0xff] %v729
        %856 = vst [vmem:[%s176 + $0x10] sm:$0xff] %v731
        %857 = vst [vmem:[%s176 + $0x18] sm:$0xff] %v733
        %858 = vst [vmem:[%s176 + $0x20] sm:$0xff] %v735
        %859 = vst [vmem:[%s176 + $0x28] sm:$0xff] %v737
        %860 = vst [vmem:[%s176 + $0x30] sm:$0xff] %v739
        %861 = vst [vmem:[%s176 + $0x38] sm:$0xff] %v741
        %862 = vst [vmem:[%s176 + $0x40] sm:$0xff] %v743
        %863 = vst [vmem:[%s176 + $0x48] sm:$0xff] %v745
        %864 = vst [vmem:[%s176 + $0x50] sm:$0xff] %v747
        %865 = vst [vmem:[%s176 + $0x58] sm:$0xff] %v749
        %866 = vst [vmem:[%s176 + $0x60] sm:$0xff] %v751
        %867 = vst [vmem:[%s176 + $0x68] sm:$0xff] %v753
        %868 = vst [vmem:[%s176 + $0x70] sm:$0xff] %v755
        %869 = vst [vmem:[%s176 + $0x78] sm:$0xff] %v757
        %870 = vst [vmem:[%s176 + $0x80] sm:$0xff] %v759
        %871 = vst [vmem:[%s176 + $0x88] sm:$0xff] %v761
        %872 = vst [vmem:[%s176 + $0x90] sm:$0xff] %v763
        %873 = vst [vmem:[%s176 + $0x98] sm:$0xff] %v765
        %874 = vst [vmem:[%s176 + $0xa0] sm:$0xff] %v767
        %875 = vst [vmem:[%s176 + $0xa8] sm:$0xff] %v769
        %876 = vst [vmem:[%s176 + $0xb0] sm:$0xff] %v771
        %877 = vst [vmem:[%s176 + $0xb8] sm:$0xff] %v773
        %878 = vst [vmem:[%s176 + $0xc0] sm:$0xff] %v775
        %879 = vst [vmem:[%s176 + $0xc8] sm:$0xff] %v777
        %880 = vst [vmem:[%s176 + $0xd0] sm:$0xff] %v779
        %881 = vst [vmem:[%s176 + $0xd8] sm:$0xff] %v781
        %882 = vst [vmem:[%s176 + $0xe0] sm:$0xff] %v783
        %883 = vst [vmem:[%s176 + $0xe8] sm:$0xff] %v785
        %884 = vst [vmem:[%s176 + $0xf0] sm:$0xff] %v787
        %885 = vst [vmem:[%s176 + $0xf8] sm:$0xff] %v789
        %886 = vst [vmem:[%s176 + $0x100] sm:$0xff] %v791
        %887 = vst [vmem:[%s176 + $0x108] sm:$0xff] %v793
        %888 = vst [vmem:[%s176 + $0x110] sm:$0xff] %v795
        %889 = vst [vmem:[%s176 + $0x118] sm:$0xff] %v797
        %890 = vst [vmem:[%s176 + $0x120] sm:$0xff] %v799
        %891 = vst [vmem:[%s176 + $0x128] sm:$0xff] %v801
        %892 = vst [vmem:[%s176 + $0x130] sm:$0xff] %v803
        %893 = vst [vmem:[%s176 + $0x138] sm:$0xff] %v805
        %894 = vst [vmem:[%s176 + $0x140] sm:$0xff] %v807
        %895 = vst [vmem:[%s176 + $0x148] sm:$0xff] %v809
        %896 = vst [vmem:[%s176 + $0x150] sm:$0xff] %v811
        %897 = vst [vmem:[%s176 + $0x158] sm:$0xff] %v813
        %898 = vst [vmem:[%s176 + $0x160] sm:$0xff] %v815
        %899 = vst [vmem:[%s176 + $0x168] sm:$0xff] %v817
        %900 = vst [vmem:[%s176 + $0x170] sm:$0xff] %v819
        %901 = vst [vmem:[%s176 + $0x178] sm:$0xff] %v821
        %902 = vst [vmem:[%s176 + $0x180] sm:$0xff] %v823
        %903 = vst [vmem:[%s176 + $0x188] sm:$0xff] %v825
        %904 = vst [vmem:[%s176 + $0x190] sm:$0xff] %v827
        %905 = vst [vmem:[%s176 + $0x198] sm:$0xff] %v829
        %906 = vst [vmem:[%s176 + $0x1a0] sm:$0xff] %v831
        %907 = vst [vmem:[%s176 + $0x1a8] sm:$0xff] %v833
        %908 = vst [vmem:[%s176 + $0x1b0] sm:$0xff] %v835
        %909 = vst [vmem:[%s176 + $0x1b8] sm:$0xff] %v837
        %910 = vst [vmem:[%s176 + $0x1c0] sm:$0xff] %v839
        %911 = vst [vmem:[%s176 + $0x1c8] sm:$0xff] %v841
        %912 = vst [vmem:[%s176 + $0x1d0] sm:$0xff] %v843
        %913 = vst [vmem:[%s176 + $0x1d8] sm:$0xff] %v845
        %914 = vst [vmem:[%s176 + $0x1e0] sm:$0xff] %v847
        %915 = vst [vmem:[%s176 + $0x1e8] sm:$0xff] %v849
        %916 = vst [vmem:[%s176 + $0x1f0] sm:$0xff] %v851
        %917 = vst [vmem:[%s176 + $0x1f8] sm:$0xff] %v853
        %v918 = vld [vmem:[%s176] sm:$0xff]
        %v919 = vld [vmem:[%s176 + $0x8] sm:$0xff]
        %v920 = vld [vmem:[%s176 + $0x10] sm:$0xff]
        %v921 = vld [vmem:[%s176 + $0x18] sm:$0xff]
        %v922 = vld [vmem:[%s176 + $0x20] sm:$0xff]
        %v923 = vld [vmem:[%s176 + $0x28] sm:$0xff]
        %v924 = vld [vmem:[%s176 + $0x30] sm:$0xff]
        %v925 = vld [vmem:[%s176 + $0x38] sm:$0xff]
        %v926 = vld [vmem:[%s176 + $0x40] sm:$0xff]
        %v927 = vld [vmem:[%s176 + $0x48] sm:$0xff]
        %v928 = vld [vmem:[%s176 + $0x50] sm:$0xff]
        %v929 = vld [vmem:[%s176 + $0x58] sm:$0xff]
        %v930 = vld [vmem:[%s176 + $0x60] sm:$0xff]
        %v931 = vld [vmem:[%s176 + $0x68] sm:$0xff]
        %v932 = vld [vmem:[%s176 + $0x70] sm:$0xff]
        %v933 = vld [vmem:[%s176 + $0x78] sm:$0xff]
        %v934 = vld [vmem:[%s176 + $0x80] sm:$0xff]
        %v935 = vld [vmem:[%s176 + $0x88] sm:$0xff]
        %v936 = vld [vmem:[%s176 + $0x90] sm:$0xff]
        %v937 = vld [vmem:[%s176 + $0x98] sm:$0xff]
        %v938 = vld [vmem:[%s176 + $0xa0] sm:$0xff]
        %v939 = vld [vmem:[%s176 + $0xa8] sm:$0xff]
        %v940 = vld [vmem:[%s176 + $0xb0] sm:$0xff]
        %v941 = vld [vmem:[%s176 + $0xb8] sm:$0xff]
        %v942 = vld [vmem:[%s176 + $0xc0] sm:$0xff]
        %v943 = vld [vmem:[%s176 + $0xc8] sm:$0xff]
        %v944 = vld [vmem:[%s176 + $0xd0] sm:$0xff]
        %v945 = vld [vmem:[%s176 + $0xd8] sm:$0xff]
        %v946 = vld [vmem:[%s176 + $0xe0] sm:$0xff]
        %v947 = vld [vmem:[%s176 + $0xe8] sm:$0xff]
        %v948 = vld [vmem:[%s176 + $0xf0] sm:$0xff]
        %v949 = vld [vmem:[%s176 + $0xf8] sm:$0xff]
        %v950 = vld [vmem:[%s176 + $0x100] sm:$0xff]
        %v951 = vld [vmem:[%s176 + $0x108] sm:$0xff]
        %v952 = vld [vmem:[%s176 + $0x110] sm:$0xff]
        %v953 = vld [vmem:[%s176 + $0x118] sm:$0xff]
        %v954 = vld [vmem:[%s176 + $0x120] sm:$0xff]
        %v955 = vld [vmem:[%s176 + $0x128] sm:$0xff]
        %v956 = vld [vmem:[%s176 + $0x130] sm:$0xff]
        %v957 = vld [vmem:[%s176 + $0x138] sm:$0xff]
        %v958 = vld [vmem:[%s176 + $0x140] sm:$0xff]
        %v959 = vld [vmem:[%s176 + $0x148] sm:$0xff]
        %v960 = vld [vmem:[%s176 + $0x150] sm:$0xff]
        %v961 = vld [vmem:[%s176 + $0x158] sm:$0xff]
        %v962 = vld [vmem:[%s176 + $0x160] sm:$0xff]
        %v963 = vld [vmem:[%s176 + $0x168] sm:$0xff]
        %v964 = vld [vmem:[%s176 + $0x170] sm:$0xff]
        %v965 = vld [vmem:[%s176 + $0x178] sm:$0xff]
        %v966 = vld [vmem:[%s176 + $0x180] sm:$0xff]
        %v967 = vld [vmem:[%s176 + $0x188] sm:$0xff]
        %v968 = vld [vmem:[%s176 + $0x190] sm:$0xff]
        %v969 = vld [vmem:[%s176 + $0x198] sm:$0xff]
        %v970 = vld [vmem:[%s176 + $0x1a0] sm:$0xff]
        %v971 = vld [vmem:[%s176 + $0x1a8] sm:$0xff]
        %v972 = vld [vmem:[%s176 + $0x1b0] sm:$0xff]
        %v973 = vld [vmem:[%s176 + $0x1b8] sm:$0xff]
        %v974 = vld [vmem:[%s176 + $0x1c0] sm:$0xff]
        %v975 = vld [vmem:[%s176 + $0x1c8] sm:$0xff]
        %v976 = vld [vmem:[%s176 + $0x1d0] sm:$0xff]
        %v977 = vld [vmem:[%s176 + $0x1d8] sm:$0xff]
        %v978 = vld [vmem:[%s176 + $0x1e0] sm:$0xff]
        %v979 = vld [vmem:[%s176 + $0x1e8] sm:$0xff]
        %v980 = vld [vmem:[%s176 + $0x1f0] sm:$0xff]
        %v981 = vld [vmem:[%s176 + $0x1f8] sm:$0xff]
        %v982 = vadd.f32 %v918, %v920
        %v983 = vadd.f32 %v982, %v922
        %v984 = vadd.f32 %v983, %v924
        %v985 = vadd.f32 %v984, %v926
        %v986 = vadd.f32 %v985, %v928
        %v987 = vadd.f32 %v986, %v930
        %v988 = vadd.f32 %v987, %v932
        %v989 = vadd.f32 %v988, %v934
        %v990 = vadd.f32 %v989, %v936
        %v991 = vadd.f32 %v990, %v938
        %v992 = vadd.f32 %v991, %v940
        %v993 = vadd.f32 %v992, %v942
        %v994 = vadd.f32 %v993, %v944
        %v995 = vadd.f32 %v994, %v946
        %v996 = vadd.f32 %v995, %v948
        %v997 = vadd.f32 %v996, %v950
        %v998 = vadd.f32 %v997, %v952
        %v999 = vadd.f32 %v998, %v954
        %v1000 = vadd.f32 %v999, %v956
        %v1001 = vadd.f32 %v1000, %v958
        %v1002 = vadd.f32 %v1001, %v960
        %v1003 = vadd.f32 %v1002, %v962
        %v1004 = vadd.f32 %v1003, %v964
        %v1005 = vadd.f32 %v1004, %v966
        %v1006 = vadd.f32 %v1005, %v968
        %v1007 = vadd.f32 %v1006, %v970
        %v1008 = vadd.f32 %v1007, %v972
        %v1009 = vadd.f32 %v1008, %v974
        %v1010 = vadd.f32 %v1009, %v976
        %v1011 = vadd.f32 %v1010, %v978
        %v1012 = vadd.f32 %v1011, %v980
        %v1013 = vrot.slane %v1012, 4
        %v1014 = vadd.f32 %v1012, %v1013
        %v1015 = vrot.slane %v1014, 2
        %v1016 = vadd.f32 %v1014, %v1015
        %v1017 = vrot.slane %v1016, 1
        %v1018 = vadd.f32 %v1016, %v1017
        %v1019 = vadd.f32 %v919, %v921
        %v1020 = vadd.f32 %v1019, %v923
        %v1021 = vadd.f32 %v1020, %v925
        %v1022 = vadd.f32 %v1021, %v927
        %v1023 = vadd.f32 %v1022, %v929
        %v1024 = vadd.f32 %v1023, %v931
        %v1025 = vadd.f32 %v1024, %v933
        %v1026 = vadd.f32 %v1025, %v935
        %v1027 = vadd.f32 %v1026, %v937
        %v1028 = vadd.f32 %v1027, %v939
        %v1029 = vadd.f32 %v1028, %v941
        %v1030 = vadd.f32 %v1029, %v943
        %v1031 = vadd.f32 %v1030, %v945
        %v1032 = vadd.f32 %v1031, %v947
        %v1033 = vadd.f32 %v1032, %v949
        %v1034 = vadd.f32 %v1033, %v951
        %v1035 = vadd.f32 %v1034, %v953
        %v1036 = vadd.f32 %v1035, %v955
        %v1037 = vadd.f32 %v1036, %v957
        %v1038 = vadd.f32 %v1037, %v959
        %v1039 = vadd.f32 %v1038, %v961
        %v1040 = vadd.f32 %v1039, %v963
        %v1041 = vadd.f32 %v1040, %v965
        %v1042 = vadd.f32 %v1041, %v967
        %v1043 = vadd.f32 %v1042, %v969
        %v1044 = vadd.f32 %v1043, %v971
        %v1045 = vadd.f32 %v1044, %v973
        %v1046 = vadd.f32 %v1045, %v975
        %v1047 = vadd.f32 %v1046, %v977
        %v1048 = vadd.f32 %v1047, %v979
        %v1049 = vadd.f32 %v1048, %v981
        %v1050 = vrot.slane %v1049, 4
        %v1051 = vadd.f32 %v1049, %v1050
        %v1052 = vrot.slane %v1051, 2
        %v1053 = vadd.f32 %v1051, %v1052
        %v1054 = vrot.slane %v1053, 1
        %v1055 = vadd.f32 %v1053, %v1054
        %v1056 = vrcp.pop %v1018
        %v1057 = vrcp.pop %v1055
        %v1058 = vmul.f32 %v918, %v1056
        %v1059 = vmul.f32 %v919, %v1057
        %v1060 = vmul.f32 %v920, %v1056
        %v1061 = vmul.f32 %v921, %v1057
        %v1062 = vmul.f32 %v922, %v1056
        %v1063 = vmul.f32 %v923, %v1057
        %v1064 = vmul.f32 %v924, %v1056
        %v1065 = vmul.f32 %v925, %v1057
        %v1066 = vmul.f32 %v926, %v1056
        %v1067 = vmul.f32 %v927, %v1057
        %v1068 = vmul.f32 %v928, %v1056
        %v1069 = vmul.f32 %v929, %v1057
        %v1070 = vmul.f32 %v930, %v1056
        %v1071 = vmul.f32 %v931, %v1057
        %v1072 = vmul.f32 %v932, %v1056
        %v1073 = vmul.f32 %v933, %v1057
        %v1074 = vmul.f32 %v934, %v1056
        %v1075 = vmul.f32 %v935, %v1057
        %v1076 = vmul.f32 %v936, %v1056
        %v1077 = vmul.f32 %v937, %v1057
        %v1078 = vmul.f32 %v938, %v1056
        %v1079 = vmul.f32 %v939, %v1057
        %v1080 = vmul.f32 %v940, %v1056
        %v1081 = vmul.f32 %v941, %v1057
        %v1082 = vmul.f32 %v942, %v1056
        %v1083 = vmul.f32 %v943, %v1057
        %v1084 = vmul.f32 %v944, %v1056
        %v1085 = vmul.f32 %v945, %v1057
        %v1086 = vmul.f32 %v946, %v1056
        %v1087 = vmul.f32 %v947, %v1057
        %v1088 = vmul.f32 %v948, %v1056
        %v1089 = vmul.f32 %v949, %v1057
        %v1090 = vmul.f32 %v950, %v1056
        %v1091 = vmul.f32 %v951, %v1057
        %v1092 = vmul.f32 %v952, %v1056
        %v1093 = vmul.f32 %v953, %v1057
        %v1094 = vmul.f32 %v954, %v1056
        %v1095 = vmul.f32 %v955, %v1057
        %v1096 = vmul.f32 %v956, %v1056
        %v1097 = vmul.f32 %v957, %v1057
        %v1098 = vmul.f32 %v958, %v1056
        %v1099 = vmul.f32 %v959, %v1057
        %v1100 = vmul.f32 %v960, %v1056
        %v1101 = vmul.f32 %v961, %v1057
        %v1102 = vmul.f32 %v962, %v1056
        %v1103 = vmul.f32 %v963, %v1057
        %v1104 = vmul.f32 %v964, %v1056
        %v1105 = vmul.f32 %v965, %v1057
        %v1106 = vmul.f32 %v966, %v1056
        %v1107 = vmul.f32 %v967, %v1057
        %v1108 = vmul.f32 %v968, %v1056
        %v1109 = vmul.f32 %v969, %v1057
        %v1110 = vmul.f32 %v970, %v1056
        %v1111 = vmul.f32 %v971, %v1057
        %v1112 = vmul.f32 %v972, %v1056
        %v1113 = vmul.f32 %v973, %v1057
        %v1114 = vmul.f32 %v974, %v1056
        %v1115 = vmul.f32 %v975, %v1057
        %v1116 = vmul.f32 %v976, %v1056
        %v1117 = vmul.f32 %v977, %v1057
        %v1118 = vmul.f32 %v978, %v1056
        %v1119 = vmul.f32 %v979, %v1057
        %v1120 = vmul.f32 %v980, %v1056
        %v1121 = vmul.f32 %v981, %v1057
        %1122 = vst [vmem:[%s176] sm:$0xff] %v1058
        %1123 = vst [vmem:[%s176 + $0x8] sm:$0xff] %v1059
        %1124 = vst [vmem:[%s176 + $0x10] sm:$0xff] %v1060
        %1125 = vst [vmem:[%s176 + $0x18] sm:$0xff] %v1061
        %1126 = vst [vmem:[%s176 + $0x20] sm:$0xff] %v1062
        %1127 = vst [vmem:[%s176 + $0x28] sm:$0xff] %v1063
        %1128 = vst [vmem:[%s176 + $0x30] sm:$0xff] %v1064
        %1129 = vst [vmem:[%s176 + $0x38] sm:$0xff] %v1065
        %1130 = vst [vmem:[%s176 + $0x40] sm:$0xff] %v1066
        %1131 = vst [vmem:[%s176 + $0x48] sm:$0xff] %v1067
        %1132 = vst [vmem:[%s176 + $0x50] sm:$0xff] %v1068
        %1133 = vst [vmem:[%s176 + $0x58] sm:$0xff] %v1069
        %1134 = vst [vmem:[%s176 + $0x60] sm:$0xff] %v1070
        %1135 = vst [vmem:[%s176 + $0x68] sm:$0xff] %v1071
        %1136 = vst [vmem:[%s176 + $0x70] sm:$0xff] %v1072
        %1137 = vst [vmem:[%s176 + $0x78] sm:$0xff] %v1073
        %1138 = vst [vmem:[%s176 + $0x80] sm:$0xff] %v1074
        %1139 = vst [vmem:[%s176 + $0x88] sm:$0xff] %v1075
        %1140 = vst [vmem:[%s176 + $0x90] sm:$0xff] %v1076
        %1141 = vst [vmem:[%s176 + $0x98] sm:$0xff] %v1077
        %1142 = vst [vmem:[%s176 + $0xa0] sm:$0xff] %v1078
        %1143 = vst [vmem:[%s176 + $0xa8] sm:$0xff] %v1079
        %1144 = vst [vmem:[%s176 + $0xb0] sm:$0xff] %v1080
        %1145 = vst [vmem:[%s176 + $0xb8] sm:$0xff] %v1081
        %1146 = vst [vmem:[%s176 + $0xc0] sm:$0xff] %v1082
        %1147 = vst [vmem:[%s176 + $0xc8] sm:$0xff] %v1083
        %1148 = vst [vmem:[%s176 + $0xd0] sm:$0xff] %v1084
        %1149 = vst [vmem:[%s176 + $0xd8] sm:$0xff] %v1085
        %1150 = vst [vmem:[%s176 + $0xe0] sm:$0xff] %v1086
        %1151 = vst [vmem:[%s176 + $0xe8] sm:$0xff] %v1087
        %1152 = vst [vmem:[%s176 + $0xf0] sm:$0xff] %v1088
        %1153 = vst [vmem:[%s176 + $0xf8] sm:$0xff] %v1089
        %1154 = vst [vmem:[%s176 + $0x100] sm:$0xff] %v1090
        %1155 = vst [vmem:[%s176 + $0x108] sm:$0xff] %v1091
        %1156 = vst [vmem:[%s176 + $0x110] sm:$0xff] %v1092
        %1157 = vst [vmem:[%s176 + $0x118] sm:$0xff] %v1093
        %1158 = vst [vmem:[%s176 + $0x120] sm:$0xff] %v1094
        %1159 = vst [vmem:[%s176 + $0x128] sm:$0xff] %v1095
        %1160 = vst [vmem:[%s176 + $0x130] sm:$0xff] %v1096
        %1161 = vst [vmem:[%s176 + $0x138] sm:$0xff] %v1097
        %1162 = vst [vmem:[%s176 + $0x140] sm:$0xff] %v1098
        %1163 = vst [vmem:[%s176 + $0x148] sm:$0xff] %v1099
        %1164 = vst [vmem:[%s176 + $0x150] sm:$0xff] %v1100
        %1165 = vst [vmem:[%s176 + $0x158] sm:$0xff] %v1101
        %1166 = vst [vmem:[%s176 + $0x160] sm:$0xff] %v1102
        %1167 = vst [vmem:[%s176 + $0x168] sm:$0xff] %v1103
        %1168 = vst [vmem:[%s176 + $0x170] sm:$0xff] %v1104
        %1169 = vst [vmem:[%s176 + $0x178] sm:$0xff] %v1105
        %1170 = vst [vmem:[%s176 + $0x180] sm:$0xff] %v1106
        %1171 = vst [vmem:[%s176 + $0x188] sm:$0xff] %v1107
        %1172 = vst [vmem:[%s176 + $0x190] sm:$0xff] %v1108
        %1173 = vst [vmem:[%s176 + $0x198] sm:$0xff] %v1109
        %1174 = vst [vmem:[%s176 + $0x1a0] sm:$0xff] %v1110
        %1175 = vst [vmem:[%s176 + $0x1a8] sm:$0xff] %v1111
        %1176 = vst [vmem:[%s176 + $0x1b0] sm:$0xff] %v1112
        %1177 = vst [vmem:[%s176 + $0x1b8] sm:$0xff] %v1113
        %1178 = vst [vmem:[%s176 + $0x1c0] sm:$0xff] %v1114
        %1179 = vst [vmem:[%s176 + $0x1c8] sm:$0xff] %v1115
        %1180 = vst [vmem:[%s176 + $0x1d0] sm:$0xff] %v1116
        %1181 = vst [vmem:[%s176 + $0x1d8] sm:$0xff] %v1117
        %1182 = vst [vmem:[%s176 + $0x1e0] sm:$0xff] %v1118
        %1183 = vst [vmem:[%s176 + $0x1e8] sm:$0xff] %v1119
        %1184 = vst [vmem:[%s176 + $0x1f0] sm:$0xff] %v1120
        %1185 = vst [vmem:[%s176 + $0x1f8] sm:$0xff] %v1121
        %s1186 = sand.u32 %s92, 1
        %s1187 = scalar_lea.sflag [#allocation3], %s1186
        %s1188 = sand.u32 %s92, 1
        %s1189 = smul.addr %s1188, 512
        %s1190 = scalar_lea.vmem [#allocation2], %s1189
        // Predicated region
        $region29: #{tpu_custom_call.1} parent=27 // pred_check
          %p1191 = pneg %p102
        $region30: #{tpu_custom_call.1} parent=27 // pred_check_branch
          %1193 = sbr.rel (%p1191) target = $region32
        $region31: #{tpu_custom_call.1} parent=27 // pred_region
          %s1194 = smul.u32 2, %s21
          %s1196 = ssub.s32 8192, 8192
          %1197 = vsyncadd %s1187, %s1196
          %s1198 = smul.addr %s20, 64
          %s1199 = sadd.s32 %s1194, %s1198
          %s1200 = smul.addr %s1199, 128
          %s1201 = scalar_lea.hbm %s2, %s1200
          %s1202 = sshll.u32 %s1190, 4
          %s1203 = int_to_ptr.vmem [resolvable:$true] %s1202
          %1208 = dma.vmem_to_hbm [thread:$0]  %s1203, 8192, %s1201, %s1187, 256, 256, 16
        $region32: #{tpu_custom_call.1} parent=27 // pred_fallthru
          _
      $region28: #{tpu_custom_call.1} parent=5 // pred_fallthru
        _
      %p1209 = scmp.le.s32.totalorder 2, %s11
      // Predicated region
      $region33: #{tpu_custom_call.1} parent=5 // pred_check
        %p1210 = pneg %p1209
      $region34: #{tpu_custom_call.1} parent=5 // pred_check_branch
        %1212 = sbr.rel (%p1210) target = $region36
      $region35: #{tpu_custom_call.1} parent=5 // pred_region
        %s1213 = ssub.s32 %s11, 2
        // Predicated region
        $region37: #{tpu_custom_call.1} parent=35 // pred_check
          %p1214 = pneg %p108
        $region38: #{tpu_custom_call.1} parent=35 // pred_check_branch
          %1216 = sbr.rel (%p1214) target = $region40
        $region39: #{tpu_custom_call.1} parent=35 // pred_region
          %s1217 = sand.u32 %s93, 1
          %s1218 = scalar_lea.sflag [#allocation3], %s1217
          %s1219 = sand.u32 %s93, 1
          %s1220 = smul.addr %s1219, 512
          %s1221 = scalar_lea.vmem [#allocation2], %s1220
          %1222 = dma.done %s1218, 8192
        $region40: #{tpu_custom_call.1} parent=35 // pred_fallthru
          _
      $region36: #{tpu_custom_call.1} parent=5 // pred_fallthru
        _
    $region6: #{tpu_custom_call.1} parent=1 // loop_footer
      %s15 = sadd.s32 1, %s11
    $region7: #{tpu_custom_call.1} parent=1 // loop_footer_branch
      %10 = sbr.rel target = $region3
    $region8: #{tpu_custom_call.1} parent=1 // loop_exit
      _
    %1223 = vsyncpa [#allocation3], 1
    %s1224 = scalar_lea.sflag [#allocation3], 1
    %1225 = vsyncpa %s1224, 1

</llo_original>
